<compile_context>
chip_gen: v7x
topology: tpu7x:2x2x1
jax: 0.10.0
libtpu: 0.0.40
codegen_flags: <defaults>
</compile_context>

<pallas_src>
import functools

import jax
import jax.numpy as jnp
from jax.experimental import pallas as pl
from jax.experimental.pallas import tpu as pltpu


_VMEM_BUDGET = 40 * 1024 * 1024      # working-set budget (fits v7x 64 MiB physical)
_VMEM_LIMIT_CAP = 48 * 1024 * 1024   # cap for the explicit scoped-VMEM request


def _round_up(n, m):
    return ((n + m - 1) // m) * m


def _cdiv(a, b):
    return (a + b - 1) // b


# ----------------------------------------------------------------------------
# Kernel
# ----------------------------------------------------------------------------
def _netd_kernel(x_ref, w1_ref, b1_ref, wh_ref, bh_ref, out_ref, *, h_chunk):
    """One batch block: out = [relu(x@W1 + b1)] @ Wh + bh, chunked over h_dim."""
    h_pad = w1_ref.shape[1]
    n_chunks = h_pad // h_chunk
    x = x_ref[...]                                         # (blk, X_dim) bf16

    def chunk_out(col):
        # Shared trunk chunk: Linear + bias + ReLU (f32), then bf16 for MXU.
        w1c = w1_ref[:, pl.ds(col, h_chunk)]
        b1c = b1_ref[:, pl.ds(col, h_chunk)]
        h = jnp.dot(x, w1c, preferred_element_type=jnp.float32)
        h = jnp.maximum(h + b1c, 0.0).astype(jnp.bfloat16)
        # Fused heads chunk.
        whc = wh_ref[pl.ds(col, h_chunk), :]
        return jnp.dot(h, whc, preferred_element_type=jnp.float32)

    if n_chunks == 1:
        acc = chunk_out(0)
    else:
        def body(c, acc):
            col = pl.multiple_of(c * h_chunk, h_chunk)
            return acc + chunk_out(col)
        acc = jax.lax.fori_loop(
            0, n_chunks, body, jnp.zeros(out_ref.shape, jnp.float32),
            unroll=True)

    out_ref[...] = (acc + bh_ref[...]).astype(out_ref.dtype)


# ----------------------------------------------------------------------------
# One-time parameter preparation (run at init / after each optimizer step).
# ----------------------------------------------------------------------------
def prepare_netd_params(w1, b1, wg, bg, wa, ba, *, h_chunk_target=512):
    """Fuse heads, pad to lane-dense widths, cast matmul operands to bf16.

    Weights are stored as (in_features, out_features) == PyTorch weight.T.
    Returns (params_dict, y_dim).
    """
    X_dim, h_dim = w1.shape
    y_dim = wa.shape[1]
    out_dim = 1 + y_dim
    out_pad = _round_up(out_dim, 128)

    # Pad h_dim so it is lane-dense and divisible by the in-kernel chunk size.
    if h_dim <= h_chunk_target:
        h_pad = _round_up(h_dim, 128)
    else:
        h_pad = _round_up(h_dim, h_chunk_target)

    w1p = jnp.zeros((X_dim, h_pad), jnp.float32).at[:, :h_dim].set(
        jnp.asarray(w1, jnp.float32))
    b1p = jnp.zeros((1, h_pad), jnp.float32).at[:, :h_dim].set(
        jnp.reshape(jnp.asarray(b1, jnp.float32), (1, h_dim)))

    # Fused heads: gan in column 0, aux in columns 1..y_dim.
    wh = jnp.zeros((h_pad, out_pad), jnp.float32)
    wh = wh.at[:h_dim, 0:1].set(jnp.asarray(wg, jnp.float32))
    wh = wh.at[:h_dim, 1:out_dim].set(jnp.asarray(wa, jnp.float32))
    bh = jnp.zeros((1, out_pad), jnp.float32)
    bh = bh.at[:, 0:1].set(jnp.reshape(jnp.asarray(bg, jnp.float32), (1, 1)))
    bh = bh.at[:, 1:out_dim].set(
        jnp.reshape(jnp.asarray(ba, jnp.float32), (1, y_dim)))

    params = {
        "w1": w1p.astype(jnp.bfloat16),   # (X_dim, h_pad)
        "b1": b1p,                        # (1, h_pad)   f32
        "wh": wh.astype(jnp.bfloat16),    # (h_pad, out_pad)
        "bh": bh,                         # (1, out_pad) f32
    }
    return params, y_dim


# ----------------------------------------------------------------------------
# Block / VMEM sizing helpers (pure Python on static shapes).
# ----------------------------------------------------------------------------
def _pick_block(B, block_b):
    if B <= 31:
        return _round_up(max(B, 1), 16)          # bf16 sublane packing
    n_steps = max(2, _cdiv(B, block_b))          # >=2 steps for megacore
    return _round_up(_cdiv(B, n_steps), 16)


def _vmem_bytes(blk, X_dim, h_pad, out_pad, h_chunk):
    x_blk = blk * X_dim * 2 * 2                  # bf16, double-buffered
    out_blk = blk * out_pad * 4 * 2              # f32, double-buffered
    w1 = X_dim * h_pad * 2                       # bf16, single-buffered
    b1 = h_pad * 4
    wh = h_pad * out_pad * 2                     # bf16, single-buffered
    bh = out_pad * 4
    interm = blk * h_chunk * 6 + blk * out_pad * 8   # h chunk (f32+bf16), acc
    return x_blk + out_blk + w1 + b1 + wh + bh + interm


# ----------------------------------------------------------------------------
# Forward
# ----------------------------------------------------------------------------
@functools.partial(jax.jit,
                   static_argnames=("y_dim", "block_b", "h_chunk_target"))
def netd_forward(x, params, *, y_dim, block_b=256, h_chunk_target=512):
    """x: (B, X_dim) f32. params from prepare_netd_params.

    Returns (gan, aux) = ((B, 1), (B, y_dim)) in f32.
    """
    w1, b1, wh, bh = params["w1"], params["b1"], params["wh"], params["bh"]
    B, X_dim = x.shape
    h_pad = w1.shape[1]
    out_pad = wh.shape[1]
    out_dim = 1 + y_dim

    h_chunk = h_pad if h_pad <= h_chunk_target else h_chunk_target

    # Batch block: >=2 grid steps when possible, multiple of 16 rows, shrunk
    # if the VMEM working set would exceed the budget.
    blk = _pick_block(B, block_b)
    while blk > 16 and _vmem_bytes(blk, X_dim, h_pad, out_pad, h_chunk) > _VMEM_BUDGET:
        blk = max(16, _round_up(blk // 2, 16))
    B_pad = _round_up(B, blk)
    grid = (B_pad // blk,)

    # Per-call x work only: pad batch and cast to bf16.
    x_pad = x if B_pad == B else jnp.pad(x, ((0, B_pad - B), (0, 0)))
    x_bf = x_pad.astype(jnp.bfloat16)

    footprint = _vmem_bytes(blk, X_dim, h_pad, out_pad, h_chunk)
    vmem_limit = int(min(_VMEM_LIMIT_CAP,
                         max(2 * footprint, 16 * 1024 * 1024)))

    cost = pl.CostEstimate(
        flops=2 * B_pad * (X_dim * h_pad + h_pad * out_pad),
        transcendentals=0,
        bytes_accessed=(x_bf.size * 2 + w1.size * 2 + wh.size * 2
                        + b1.size * 4 + bh.size * 4 + B_pad * out_pad * 4),
    )

    kernel = functools.partial(_netd_kernel, h_chunk=h_chunk)

    out = pl.pallas_call(
        kernel,
        out_shape=jax.ShapeDtypeStruct((B_pad, out_pad), jnp.float32),
        grid=grid,
        in_specs=[
            pl.BlockSpec((blk, X_dim), lambda i: (i, 0)),           # x rows
            pl.BlockSpec((X_dim, h_pad), lambda i: (0, 0),          # W_shared
                         pipeline_mode=pl.Buffered(1)),
            pl.BlockSpec((1, h_pad), lambda i: (0, 0),              # b_shared
                         pipeline_mode=pl.Buffered(1)),
            pl.BlockSpec((h_pad, out_pad), lambda i: (0, 0),        # fused head W
                         pipeline_mode=pl.Buffered(1)),
            pl.BlockSpec((1, out_pad), lambda i: (0, 0),            # fused head b
                         pipeline_mode=pl.Buffered(1)),
        ],
        out_specs=pl.BlockSpec((blk, out_pad), lambda i: (i, 0)),
        compiler_params=pltpu.CompilerParams(
            dimension_semantics=("parallel",),
            vmem_limit_bytes=vmem_limit),
        cost_estimate=cost,
    )(x_bf, w1, b1, wh, bh)

    # Padded rows/lanes carry junk (relu(b1)@Wh + bh); always slice before use.
    gan = out[:B, 0:1]
    aux = out[:B, 1:out_dim]
    return gan, aux


# ----------------------------------------------------------------------------
# Pure-JAX reference mirroring the kernel's bf16-operand / f32-accum math.
# ----------------------------------------------------------------------------
def netd_reference(x, w1, b1, wg, bg, wa, ba):
    xb = x.astype(jnp.bfloat16)
    h = jnp.dot(xb, w1.astype(jnp.bfloat16),
                preferred_element_type=jnp.float32) + b1.reshape(1, -1)
    h = jnp.maximum(h, 0.0)
    hb = h.astype(jnp.bfloat16)
    gan = jnp.dot(hb, wg.astype(jnp.bfloat16),
                  preferred_element_type=jnp.float32) + bg.reshape(1, 1)
    aux = jnp.dot(hb, wa.astype(jnp.bfloat16),
                  preferred_element_type=jnp.float32) + ba.reshape(1, -1)
    return gan, aux


if __name__ == "__main__":
    # Small shapes consistent with the module (Linear -> ReLU -> two Linear heads).
    B, X_dim, h_dim, y_dim = 8, 256, 128, 16

    key = jax.random.PRNGKey(0)
    k_x, k_w1, k_b1, k_wg, k_bg, k_wa, k_ba = jax.random.split(key, 7)

    x  = jax.random.normal(k_x,  (B, X_dim), dtype=jnp.float32)
    # Weights stored as (in, out) == PyTorch weight.T ; deterministic init.
    w1 = jax.random.normal(k_w1, (X_dim, h_dim), dtype=jnp.float32) * 0.02
    b1 = jax.random.normal(k_b1, (1, h_dim), dtype=jnp.float32) * 0.02
    wg = jax.random.normal(k_wg, (h_dim, 1), dtype=jnp.float32) * 0.02
    bg = jax.random.normal(k_bg, (1, 1), dtype=jnp.float32) * 0.02
    wa = jax.random.normal(k_wa, (h_dim, y_dim), dtype=jnp.float32) * 0.02
    ba = jax.random.normal(k_ba, (1, y_dim), dtype=jnp.float32) * 0.02

    # One-time weight prep (would be redone only after a parameter update).
    params, y_dim_out = prepare_netd_params(w1, b1, wg, bg, wa, ba)

    gan_out, aux_out = jax.block_until_ready(
        netd_forward(x, params, y_dim=y_dim_out)
    )

    gan_ref, aux_ref = netd_reference(x, w1, b1, wg, bg, wa, ba)
    assert gan_out.shape == (B, 1) and aux_out.shape == (B, y_dim)
    assert jnp.allclose(gan_out, gan_ref, atol=2e-3, rtol=2e-2), (
        float(jnp.max(jnp.abs(gan_out - gan_ref))))
    assert jnp.allclose(aux_out, aux_ref, atol=2e-3, rtol=2e-2), (
        float(jnp.max(jnp.abs(aux_out - aux_ref))))

    print("KERNEL_OK")
</pallas_src>

<mosaic_0001>
module attributes {stable_mosaic.version = 11 : i64} {
  func.func @_netd_kernel(%arg0: i32, %arg1: memref<16x256xbf16, #tpu.memory_space<vmem>>, %arg2: memref<256x128xbf16, #tpu.memory_space<vmem>>, %arg3: memref<1x128xf32, #tpu.memory_space<vmem>>, %arg4: memref<128x128xbf16, #tpu.memory_space<vmem>>, %arg5: memref<1x128xf32, #tpu.memory_space<vmem>>, %arg6: memref<16x128xf32, #tpu.memory_space<vmem>>) attributes {dimension_semantics = [#tpu.dimension_semantics<parallel>], iteration_bounds = array<i64: 1>, scalar_prefetch = 0 : i64, scratch_operands = 0 : i64, tpu.core_type = #tpu.core_type<tc>, window_params = [{transform_indices = @transform_0, window_bounds = array<i64: 16, 256>}, {pipeline_mode = #tpu.pipeline_mode<synchronous>, transform_indices = @transform_1, window_bounds = array<i64: 256, 128>}, {pipeline_mode = #tpu.pipeline_mode<synchronous>, transform_indices = @transform_2, window_bounds = array<i64: 1, 128>}, {pipeline_mode = #tpu.pipeline_mode<synchronous>, transform_indices = @transform_3, window_bounds = array<i64: 128, 128>}, {pipeline_mode = #tpu.pipeline_mode<synchronous>, transform_indices = @transform_4, window_bounds = array<i64: 1, 128>}, {transform_indices = @transform_5, window_bounds = array<i64: 16, 128>}]} {
    %c0 = arith.constant 0 : index
    %c0_0 = arith.constant 0 : index
    %0 = vector.load %arg1[%c0, %c0_0] : memref<16x256xbf16, #tpu.memory_space<vmem>>, vector<16x256xbf16>
    %c0_1 = arith.constant 0 : index
    %c0_2 = arith.constant 0 : index
    %1 = vector.load %arg2[%c0_1, %c0_2] : memref<256x128xbf16, #tpu.memory_space<vmem>>, vector<256x128xbf16>
    %c0_3 = arith.constant 0 : index
    %c0_4 = arith.constant 0 : index
    %2 = vector.load %arg3[%c0_3, %c0_4] : memref<1x128xf32, #tpu.memory_space<vmem>>, vector<1x128xf32>
    %cst = arith.constant dense<0.000000e+00> : vector<16x128xf32>
    %3 = tpu.matmul %0, %1, %cst {dimension_numbers = #tpu.dot_dimension_numbers<[1], [0], [0], [1], [0, 0, 1, 1], [], []>} : vector<16x256xbf16>, vector<256x128xbf16>, vector<16x128xf32> -> vector<16x128xf32>
    %4 = vector.broadcast %2 : vector<1x128xf32> to vector<16x128xf32>
    %5 = arith.addf %3, %4 : vector<16x128xf32>
    %cst_5 = arith.constant 0.000000e+00 : f32
    %6 = vector.broadcast %cst_5 : f32 to vector<16x128xf32>
    %7 = arith.maximumf %5, %6 : vector<16x128xf32>
    %8 = arith.truncf %7 : vector<16x128xf32> to vector<16x128xbf16>
    %c0_6 = arith.constant 0 : index
    %c0_7 = arith.constant 0 : index
    %9 = vector.load %arg4[%c0_6, %c0_7] : memref<128x128xbf16, #tpu.memory_space<vmem>>, vector<128x128xbf16>
    %cst_8 = arith.constant dense<0.000000e+00> : vector<16x128xf32>
    %10 = tpu.matmul %8, %9, %cst_8 {dimension_numbers = #tpu.dot_dimension_numbers<[1], [0], [0], [1], [0, 0, 1, 1], [], []>} : vector<16x128xbf16>, vector<128x128xbf16>, vector<16x128xf32> -> vector<16x128xf32>
    %c0_9 = arith.constant 0 : index
    %c0_10 = arith.constant 0 : index
    %11 = vector.load %arg5[%c0_9, %c0_10] : memref<1x128xf32, #tpu.memory_space<vmem>>, vector<1x128xf32>
    %12 = vector.broadcast %11 : vector<1x128xf32> to vector<16x128xf32>
    %13 = arith.addf %10, %12 : vector<16x128xf32>
    %c0_11 = arith.constant 0 : index
    %c0_12 = arith.constant 0 : index
    %14 = vector.load %arg6[%c0_11, %c0_12] : memref<16x128xf32, #tpu.memory_space<vmem>>, vector<16x128xf32>
    tpu.vector_store %arg6[%c0_11, %c0_12], %13 {strides = array<i32>} : memref<16x128xf32, #tpu.memory_space<vmem>>, vector<16x128xf32>,
    return
  }
  func.func @transform_0(%arg0: i32) -> (i32, i32) {
    %c0_i32 = arith.constant 0 : i32
    %c0_i32_0 = arith.constant 0 : i32
    return %arg0, %c0_i32 : i32, i32
  }
  func.func @transform_1(%arg0: i32) -> (i32, i32) {
    %c0_i32 = arith.constant 0 : i32
    %c0_i32_0 = arith.constant 0 : i32
    %c0_i32_1 = arith.constant 0 : i32
    return %c0_i32, %c0_i32_0 : i32, i32
  }
  func.func @transform_2(%arg0: i32) -> (i32, i32) {
    %c0_i32 = arith.constant 0 : i32
    %c0_i32_0 = arith.constant 0 : i32
    %c0_i32_1 = arith.constant 0 : i32
    return %c0_i32, %c0_i32_0 : i32, i32
  }
  func.func @transform_3(%arg0: i32) -> (i32, i32) {
    %c0_i32 = arith.constant 0 : i32
    %c0_i32_0 = arith.constant 0 : i32
    %c0_i32_1 = arith.constant 0 : i32
    return %c0_i32, %c0_i32_0 : i32, i32
  }
  func.func @transform_4(%arg0: i32) -> (i32, i32) {
    %c0_i32 = arith.constant 0 : i32
    %c0_i32_0 = arith.constant 0 : i32
    %c0_i32_1 = arith.constant 0 : i32
    return %c0_i32, %c0_i32_0 : i32, i32
  }
  func.func @transform_5(%arg0: i32) -> (i32, i32) {
    %c0_i32 = arith.constant 0 : i32
    %c0_i32_0 = arith.constant 0 : i32
    return %arg0, %c0_i32 : i32, i32
  }
}

</mosaic_0001>

<llo_original>
// kernel: netd_forward.1
$region0: #{netd_forward.1}
  #allocation0 [shape = 'u32[]', space=smem, size = 0x4, offset = 0x4, fixed_abs, tag = 'smem constant byte address 0x4 - core index']
  #allocation1 [shape = 'u32[144,128]{1,0:T(1,128)}', space=vmem, size = 0x12000, scoped, tag = 'internal scratch']
  %s0 = inlined_call_operand.vmem [shape: bf16[16,256], index: 0, kind: input, shape index: {}]
  %s1 = inlined_call_operand.hbm [shape: bf16[256,128], index: 1, kind: input, shape index: {}]
  %s2 = inlined_call_operand.hbm [shape: f32[1,128], index: 2, kind: input, shape index: {}]
  %s3 = inlined_call_operand.vmem [shape: bf16[128,128], index: 3, kind: input, shape index: {}]
  %s4 = inlined_call_operand.hbm [shape: f32[1,128], index: 4, kind: input, shape index: {}]
  %s5 = inlined_call_operand.vmem [shape: f32[16,128], index: 5, kind: output, shape index: {}]
  %s6 = sld [smem:[#allocation0]]
  $region42: #{netd_forward.1} parent=0
    _
  %s8 = ssub.s32 1, %s6
  %s9 = scalar_select 0, %s8, %s6
  $region1: #{netd_forward.1} parent=0
    #allocation2 [shape = 'u8[65536]{0}', space=vmem, size = 0x10000, scoped, tag = 'input window, operand 1, single buffered']
    #allocation3 [shape = 's32[1]{0}', space=sflag, size = 0x4, scoped, tag = 'scoped memory for netd_forward.1']
    #allocation4 [shape = 'u8[512]{0}', space=vmem, size = 0x400, scoped, tag = 'input window, operand 2, single buffered']
    #allocation5 [shape = 's32[1]{0}', space=sflag, size = 0x4, scoped, tag = 'scoped memory for netd_forward.1']
    #allocation6 [shape = 'u8[512]{0}', space=vmem, size = 0x400, scoped, tag = 'input window, operand 4, single buffered']
    %10 = vsyncpa [#allocation3], 0
    %11 = vsyncpa [#allocation5], 0
    // Predicated region
    $region2: #{netd_forward.1} parent=1 // pred_check
      _
    $region3: #{netd_forward.1} parent=1 // pred_check_branch
      %13 = sbr.rel (0) target = $region5
    $region4: #{netd_forward.1} parent=1 // pred_region
      _
    $region5: #{netd_forward.1} parent=1 // pred_fallthru
      _
    // Predicated region
    $region6: #{netd_forward.1} parent=1 // pred_check
      _
    $region7: #{netd_forward.1} parent=1 // pred_check_branch
      %15 = sbr.rel (0) target = $region9
    $region8: #{netd_forward.1} parent=1 // pred_region
      %s17 = ssub.s32 2048, 2048
      %18 = vsyncadd [#allocation3], %s17
      %s19 = sshll.u32 [#allocation2], 4
      %s20 = int_to_ptr.vmem [resolvable:$true] %s19
      %25 = dma.hbm_to_vmem [thread:$0]  %s1, 2048, %s20, [#allocation3], 64, 64, 4
    $region9: #{netd_forward.1} parent=1 // pred_fallthru
      _
    // Predicated region
    $region10: #{netd_forward.1} parent=1 // pred_check
      _
    $region11: #{netd_forward.1} parent=1 // pred_check_branch
      %27 = sbr.rel (0) target = $region13
    $region12: #{netd_forward.1} parent=1 // pred_region
      %s29 = ssub.s32 16, 16
      %30 = vsyncadd [#allocation5], %s29
      %s32 = sshll.u32 [#allocation4], 4
      %s33 = int_to_ptr.vmem [resolvable:$true] %s32
      %35 = dma.hbm_to_vmem [thread:$0]  %s2, 16, %s33, [#allocation5]
    $region13: #{netd_forward.1} parent=1 // pred_fallthru
      _
    // Predicated region
    $region14: #{netd_forward.1} parent=1 // pred_check
      _
    $region15: #{netd_forward.1} parent=1 // pred_check_branch
      %37 = sbr.rel (0) target = $region17
    $region16: #{netd_forward.1} parent=1 // pred_region
      _
    $region17: #{netd_forward.1} parent=1 // pred_fallthru
      _
    // Predicated region
    $region18: #{netd_forward.1} parent=1 // pred_check
      _
    $region19: #{netd_forward.1} parent=1 // pred_check_branch
      %39 = sbr.rel (0) target = $region21
    $region20: #{netd_forward.1} parent=1 // pred_region
      %s41 = ssub.s32 16, 16
      %42 = vsyncadd [#allocation5], %s41
      %s44 = sshll.u32 [#allocation6], 4
      %s45 = int_to_ptr.vmem [resolvable:$true] %s44
      %47 = dma.hbm_to_vmem [thread:$0]  %s4, 16, %s45, [#allocation5]
    $region21: #{netd_forward.1} parent=1 // pred_fallthru
      _
    // Predicated region
    $region22: #{netd_forward.1} parent=1 // pred_check
      _
    $region23: #{netd_forward.1} parent=1 // pred_check_branch
      %49 = sbr.rel (0) target = $region25
    $region24: #{netd_forward.1} parent=1 // pred_region
      %50 = dma.done [#allocation3], 2048
    $region25: #{netd_forward.1} parent=1 // pred_fallthru
      _
    // Predicated region
    $region26: #{netd_forward.1} parent=1 // pred_check
      _
    $region27: #{netd_forward.1} parent=1 // pred_check_branch
      %52 = sbr.rel (0) target = $region29
    $region28: #{netd_forward.1} parent=1 // pred_region
      %53 = dma.done [#allocation5], 16
    $region29: #{netd_forward.1} parent=1 // pred_fallthru
      _
    // Predicated region
    $region30: #{netd_forward.1} parent=1 // pred_check
      _
    $region31: #{netd_forward.1} parent=1 // pred_check_branch
      %55 = sbr.rel (0) target = $region33
    $region32: #{netd_forward.1} parent=1 // pred_region
      %56 = dma.done [#allocation5], 16
    $region33: #{netd_forward.1} parent=1 // pred_fallthru
      _
    %v58 = vld [vmem:[%s0] sm:$0xff]
    %v59 = vld [vmem:[%s0 + $0x8] sm:$0xff]
    %v60 = vld [vmem:[#allocation2] sm:$0xf]
    %v61 = vld [vmem:[#allocation2 + $0x4] sm:$0xf]
    %v62 = vld [vmem:[#allocation2 + $0x8] sm:$0xf]
    %v63 = vld [vmem:[#allocation2 + $0xc] sm:$0xf]
    %v64 = vld [vmem:[#allocation2 + $0x10] sm:$0xf]
    %v65 = vld [vmem:[#allocation2 + $0x14] sm:$0xf]
    %v66 = vld [vmem:[#allocation2 + $0x18] sm:$0xf]
    %v67 = vld [vmem:[#allocation2 + $0x1c] sm:$0xf]
    %v68 = vld [vmem:[#allocation2 + $0x20] sm:$0xf]
    %v69 = vld [vmem:[#allocation2 + $0x24] sm:$0xf]
    %v70 = vld [vmem:[#allocation2 + $0x28] sm:$0xf]
    %v71 = vld [vmem:[#allocation2 + $0x2c] sm:$0xf]
    %v72 = vld [vmem:[#allocation2 + $0x30] sm:$0xf]
    %v73 = vld [vmem:[#allocation2 + $0x34] sm:$0xf]
    %v74 = vld [vmem:[#allocation2 + $0x38] sm:$0xf]
    %v75 = vld [vmem:[#allocation2 + $0x3c] sm:$0xf]
    %v76 = vld [vmem:[#allocation2 + $0x40] sm:$0xf]
    %v77 = vld [vmem:[#allocation2 + $0x44] sm:$0xf]
    %v78 = vld [vmem:[#allocation2 + $0x48] sm:$0xf]
    %v79 = vld [vmem:[#allocation2 + $0x4c] sm:$0xf]
    %v80 = vld [vmem:[#allocation2 + $0x50] sm:$0xf]
    %v81 = vld [vmem:[#allocation2 + $0x54] sm:$0xf]
    %v82 = vld [vmem:[#allocation2 + $0x58] sm:$0xf]
    %v83 = vld [vmem:[#allocation2 + $0x5c] sm:$0xf]
    %v84 = vld [vmem:[#allocation2 + $0x60] sm:$0xf]
    %v85 = vld [vmem:[#allocation2 + $0x64] sm:$0xf]
    %v86 = vld [vmem:[#allocation2 + $0x68] sm:$0xf]
    %v87 = vld [vmem:[#allocation2 + $0x6c] sm:$0xf]
    %v88 = vld [vmem:[#allocation2 + $0x70] sm:$0xf]
    %v89 = vld [vmem:[#allocation2 + $0x74] sm:$0xf]
    %v90 = vld [vmem:[#allocation2 + $0x78] sm:$0xf]
    %v91 = vld [vmem:[#allocation2 + $0x7c] sm:$0xf]
    %v92 = vld [vmem:[#allocation4] sm:$0x1]
    %v94 = vlaneseq
    %v95 = vshrl.u32 %v94, 7
    %v96 = vsub.s32 0, %v95
    %v97 = vrot.slane %v92, %v96
    %v101 = vunpack.c.l.b16 %v58
    %v102 = vunpack.c.h.b16 %v58
    %v103 = vunpack.c.l.b16 %v59
    %v104 = vunpack.c.h.b16 %v59
    %v105 = vpack.c.b16 %v103, %v101
    %v106 = vpack.c.b16 %v104, %v102
    %v141 = vunpack.c.l.b16 %v60
    %v142 = vunpack.c.l.b16 %v61
    %v143 = vunpack.c.l.b16 %v62
    %v144 = vunpack.c.l.b16 %v63
    %v145 = vunpack.c.l.b16 %v64
    %v146 = vunpack.c.l.b16 %v65
    %v147 = vunpack.c.l.b16 %v66
    %v148 = vunpack.c.l.b16 %v67
    %v149 = vunpack.c.l.b16 %v68
    %v150 = vunpack.c.l.b16 %v69
    %v151 = vunpack.c.l.b16 %v70
    %v152 = vunpack.c.l.b16 %v71
    %v153 = vunpack.c.l.b16 %v72
    %v154 = vunpack.c.l.b16 %v73
    %v155 = vunpack.c.l.b16 %v74
    %v156 = vunpack.c.l.b16 %v75
    %v157 = vunpack.c.l.b16 %v76
    %v158 = vunpack.c.l.b16 %v77
    %v159 = vunpack.c.l.b16 %v78
    %v160 = vunpack.c.l.b16 %v79
    %v161 = vunpack.c.l.b16 %v80
    %v162 = vunpack.c.l.b16 %v81
    %v163 = vunpack.c.l.b16 %v82
    %v164 = vunpack.c.l.b16 %v83
    %v165 = vunpack.c.l.b16 %v84
    %v166 = vunpack.c.l.b16 %v85
    %v167 = vunpack.c.l.b16 %v86
    %v168 = vunpack.c.l.b16 %v87
    %v169 = vunpack.c.l.b16 %v88
    %v170 = vunpack.c.l.b16 %v89
    %v171 = vunpack.c.l.b16 %v90
    %v172 = vunpack.c.l.b16 %v91
    %v173 = vpack.c.b16 %v142, %v141
    %v174 = vpack.c.b16 %v144, %v143
    %v175 = vpack.c.b16 %v146, %v145
    %v176 = vpack.c.b16 %v148, %v147
    %v177 = vpack.c.b16 %v150, %v149
    %v178 = vpack.c.b16 %v152, %v151
    %v179 = vpack.c.b16 %v154, %v153
    %v180 = vpack.c.b16 %v156, %v155
    %v181 = vpack.c.b16 %v158, %v157
    %v182 = vpack.c.b16 %v160, %v159
    %v183 = vpack.c.b16 %v162, %v161
    %v184 = vpack.c.b16 %v164, %v163
    %v185 = vpack.c.b16 %v166, %v165
    %v186 = vpack.c.b16 %v168, %v167
    %v187 = vpack.c.b16 %v170, %v169
    %v188 = vpack.c.b16 %v172, %v171
    %205 = vmatprep.subr.bf16.mxu0 0
    %206 = vmatpush1.bf16.msra.mxu0 %v173
    %207 = vmatprep.subr.bf16.mxu0 0
    %208 = vmatpush1.bf16.msra.mxu0 %v174
    %209 = vmatprep.subr.bf16.mxu0 0
    %210 = vmatpush1.bf16.msra.mxu0 %v175
    %211 = vmatprep.subr.bf16.mxu0 0
    %212 = vmatpush1.bf16.msra.mxu0 %v176
    %213 = vmatprep.subr.bf16.mxu0 0
    %214 = vmatpush1.bf16.msra.mxu0 %v177
    %215 = vmatprep.subr.bf16.mxu0 0
    %216 = vmatpush1.bf16.msra.mxu0 %v178
    %217 = vmatprep.subr.bf16.mxu0 0
    %218 = vmatpush1.bf16.msra.mxu0 %v179
    %219 = vmatprep.subr.bf16.mxu0 0
    %220 = vmatpush1.bf16.msra.mxu0 %v180
    %221 = vmatprep.subr.bf16.mxu0 0
    %222 = vmatpush1.bf16.msra.mxu0 %v181
    %223 = vmatprep.subr.bf16.mxu0 0
    %224 = vmatpush1.bf16.msra.mxu0 %v182
    %225 = vmatprep.subr.bf16.mxu0 0
    %226 = vmatpush1.bf16.msra.mxu0 %v183
    %227 = vmatprep.subr.bf16.mxu0 0
    %228 = vmatpush1.bf16.msra.mxu0 %v184
    %229 = vmatprep.subr.bf16.mxu0 0
    %230 = vmatpush1.bf16.msra.mxu0 %v185
    %231 = vmatprep.subr.bf16.mxu0 0
    %232 = vmatpush1.bf16.msra.mxu0 %v186
    %233 = vmatprep.subr.bf16.mxu0 0
    %234 = vmatpush1.bf16.msra.mxu0 %v187
    %235 = vmatprep.subr.bf16.mxu0 0
    %236 = vmatpush1.bf16.msra.mxu0 %v188
    %237 = vmatprep.mubr.bf16.mxu0 %v106
    %238 = vmatmul.mubr.bf16.gmra.mrb[0].mxu0 %v105
    %v239 = vpop.f32.mrb[0].mxu0
    %v240 = vadd.f32 %v97, %v239
    %v241 = vpop.f32.mrb[0].mxu0
    %v242 = vpop.f32.mrb[0].mxu0
    %v243 = vadd.f32 %v97, %v242
    %v244 = vpop.f32.mrb[0].mxu0
    %245 = vdwg.mxu0
    %v246 = vmax.f32 %v240, 0.0
    %v247 = vmax.f32 %v243, 0.0
    %v248 = vpack.c.bf16 %v247, %v246
    %v249 = vld [vmem:[%s3] sm:$0xf]
    %v250 = vld [vmem:[%s3 + $0x4] sm:$0xf]
    %v251 = vld [vmem:[%s3 + $0x8] sm:$0xf]
    %v252 = vld [vmem:[%s3 + $0xc] sm:$0xf]
    %v253 = vld [vmem:[%s3 + $0x10] sm:$0xf]
    %v254 = vld [vmem:[%s3 + $0x14] sm:$0xf]
    %v255 = vld [vmem:[%s3 + $0x18] sm:$0xf]
    %v256 = vld [vmem:[%s3 + $0x1c] sm:$0xf]
    %v257 = vld [vmem:[%s3 + $0x20] sm:$0xf]
    %v258 = vld [vmem:[%s3 + $0x24] sm:$0xf]
    %v259 = vld [vmem:[%s3 + $0x28] sm:$0xf]
    %v260 = vld [vmem:[%s3 + $0x2c] sm:$0xf]
    %v261 = vld [vmem:[%s3 + $0x30] sm:$0xf]
    %v262 = vld [vmem:[%s3 + $0x34] sm:$0xf]
    %v263 = vld [vmem:[%s3 + $0x38] sm:$0xf]
    %v264 = vld [vmem:[%s3 + $0x3c] sm:$0xf]
    %v265 = vld [vmem:[#allocation6] sm:$0x1]
    %v267 = vlaneseq
    %v268 = vshrl.u32 %v267, 7
    %v269 = vsub.s32 0, %v268
    %v270 = vrot.slane %v265, %v269
    %v288 = vunpack.c.l.b16 %v249
    %v289 = vunpack.c.l.b16 %v250
    %v290 = vunpack.c.l.b16 %v251
    %v291 = vunpack.c.l.b16 %v252
    %v292 = vunpack.c.l.b16 %v253
    %v293 = vunpack.c.l.b16 %v254
    %v294 = vunpack.c.l.b16 %v255
    %v295 = vunpack.c.l.b16 %v256
    %v296 = vunpack.c.l.b16 %v257
    %v297 = vunpack.c.l.b16 %v258
    %v298 = vunpack.c.l.b16 %v259
    %v299 = vunpack.c.l.b16 %v260
    %v300 = vunpack.c.l.b16 %v261
    %v301 = vunpack.c.l.b16 %v262
    %v302 = vunpack.c.l.b16 %v263
    %v303 = vunpack.c.l.b16 %v264
    %v304 = vpack.c.b16 %v289, %v288
    %v305 = vpack.c.b16 %v291, %v290
    %v306 = vpack.c.b16 %v293, %v292
    %v307 = vpack.c.b16 %v295, %v294
    %v308 = vpack.c.b16 %v297, %v296
    %v309 = vpack.c.b16 %v299, %v298
    %v310 = vpack.c.b16 %v301, %v300
    %v311 = vpack.c.b16 %v303, %v302
    %320 = vmatprep.subr.bf16.mxu0 0
    %321 = vmatpush1.bf16.msra.mxu0 %v304
    %322 = vmatprep.subr.bf16.mxu0 0
    %323 = vmatpush1.bf16.msra.mxu0 %v305
    %324 = vmatprep.subr.bf16.mxu0 0
    %325 = vmatpush1.bf16.msra.mxu0 %v306
    %326 = vmatprep.subr.bf16.mxu0 0
    %327 = vmatpush1.bf16.msra.mxu0 %v307
    %328 = vmatprep.subr.bf16.mxu0 0
    %329 = vmatpush1.bf16.msra.mxu0 %v308
    %330 = vmatprep.subr.bf16.mxu0 0
    %331 = vmatpush1.bf16.msra.mxu0 %v309
    %332 = vmatprep.subr.bf16.mxu0 0
    %333 = vmatpush1.bf16.msra.mxu0 %v310
    %334 = vmatprep.subr.bf16.mxu0 0
    %335 = vmatpush1.bf16.msra.mxu0 %v311
    %336 = vmatprep.subr.bf16.mxu0 0
    %337 = vmatpush1.bf16.msra.mxu0 0
    %338 = vmatprep.subr.bf16.mxu0 0
    %339 = vmatpush1.bf16.msra.mxu0 0
    %340 = vmatprep.subr.bf16.mxu0 0
    %341 = vmatpush1.bf16.msra.mxu0 0
    %342 = vmatprep.subr.bf16.mxu0 0
    %343 = vmatpush1.bf16.msra.mxu0 0
    %344 = vmatprep.subr.bf16.mxu0 0
    %345 = vmatpush1.bf16.msra.mxu0 0
    %346 = vmatprep.subr.bf16.mxu0 0
    %347 = vmatpush1.bf16.msra.mxu0 0
    %348 = vmatprep.subr.bf16.mxu0 0
    %349 = vmatpush1.bf16.msra.mxu0 0
    %350 = vmatprep.subr.bf16.mxu0 0
    %351 = vmatpush1.bf16.msra.mxu0 0
    %352 = vmatprep.mubr.bf16.mxu0 0
    %353 = vmatmul.mubr.bf16.gmra.mrb[0].mxu0 %v248
    %v354 = vpop.f32.mrb[0].mxu0
    %v355 = vadd.f32 %v270, %v354
    %v356 = vpop.f32.mrb[0].mxu0
    %v357 = vpop.f32.mrb[0].mxu0
    %v358 = vadd.f32 %v270, %v357
    %v359 = vpop.f32.mrb[0].mxu0
    %360 = vdwg.mxu0
    %361 = vst [vmem:[%s5] sm:$0xff] %v355
    %362 = vst [vmem:[%s5 + $0x8] sm:$0xff] %v358
    // Predicated region
    $region34: #{netd_forward.1} parent=1 // pred_check
      _
    $region35: #{netd_forward.1} parent=1 // pred_check_branch
      %364 = sbr.rel (0) target = $region37
    $region36: #{netd_forward.1} parent=1 // pred_region
      _
    $region37: #{netd_forward.1} parent=1 // pred_fallthru
      _
    // Predicated region
    $region38: #{netd_forward.1} parent=1 // pred_check
      _
    $region39: #{netd_forward.1} parent=1 // pred_check_branch
      %366 = sbr.rel (0) target = $region41
    $region40: #{netd_forward.1} parent=1 // pred_region
      _
    $region41: #{netd_forward.1} parent=1 // pred_fallthru
      _
    %367 = vsyncpa [#allocation3], 1
    %368 = vsyncpa [#allocation5], 1

</llo_original>
